<compile_context>
chip_gen: v5e
topology: v5e:2x2
jax: 0.10.0
libtpu: 0.0.40
codegen_flags: <defaults>
</compile_context>

<pallas_src>
import jax
import jax.numpy as jnp
from jax.experimental import pallas as pl
from jax.experimental.pallas import tpu as pltpu

# ----------------------------- model sizes (small demo) -----------------------
N_NODES = 16          # total nodes (2 graphs x 8 nodes, block-diagonal batch)
N_GRAPHS = 2
IN_CH = 16            # in_channels
HID = 8               # hidden_channels (module default 64; small demo value)
HEADS = 8             # heads
OUT_CH = 4            # out_channels
NEG_SLOPE = 0.2       # PyG GATConv LeakyReLU default
NEG_INF = -1e9        # additive mask value for non-edges


# ------------------------------ Pallas kernel ---------------------------------
def _gat_model_kernel(x_ref, mask1_ref, mask2_ref,
                      w1_ref, tilemat_ref, blkmask_ref, asrc1_ref, adstrep_ref,
                      b1_ref, w2_ref, asrc2_ref, adst2_ref, b2_ref,
                      out_ref):
    f32 = jnp.float32

    # ========== layer 1: GATConv(IN_CH, HID, heads=H, concat=True) ============
    xp = jnp.dot(x_ref[...], w1_ref[...], preferred_element_type=f32)   # [N, H*hid]
    blkmask = blkmask_ref[...]                                          # [H*N, H*hid], (h==g)
    # Block-diagonal stack of per-head projected features:
    #   xblk[h*N + j, g*hid + d] = xp[j, g*hid + d] * (h == g)
    # (tilemat = H vertically stacked identities; rides the otherwise idle MXU.)
    xblk = jnp.dot(tilemat_ref[...], xp, preferred_element_type=f32) * blkmask

    # All-head attention logits packed on the lane axis ([N, H*N] = [16, 128]):
    #   e[i, h*N + j] = <a_dst_h, xp_i^(h)> + <a_src_h, xp_j^(h)>
    a_d = jnp.dot(xp, adstrep_ref[...], preferred_element_type=f32)     # [N, H*N]
    a_s = jnp.dot(xblk, asrc1_ref[...], preferred_element_type=f32)     # [H*N, 1]
    e = a_d + a_s.T                                                     # [N, H*N]
    e = jnp.where(e > 0, e, NEG_SLOPE * e)                              # LeakyReLU
    e = e + mask1_ref[...]                                              # 0 on edges, -1e9 off
    # Shared per-row max across heads: per-head softmax is invariant to a per-row
    # constant shift; logits are O(1) so no head can underflow entirely and exp()
    # can never overflow.  Self-loops guarantee >=1 live entry per head/row.
    e = e - jnp.max(e, axis=-1, keepdims=True)
    p = jnp.exp(e)                                                      # [N, H*N]

    # Per-head aggregation (+ implicit concat) and per-head softmax denominators
    # as two lane-dense [N, H*N] x [H*N, H*hid] MXU matmuls; no concatenate.
    numer = jnp.dot(p, xblk, preferred_element_type=f32)                # [N, H*hid]
    denom = jnp.dot(p, blkmask, preferred_element_type=f32)             # [N, H*hid]
    h1 = numer / denom + b1_ref[...]
    # ReLU; F.dropout(p=0.5) and GATConv attention dropout are identity in eval.
    # TODO(synk): training-mode dropout not implemented (inference forward only).
    h1 = jnp.maximum(h1, 0.0)

    # ========== layer 2: GATConv(H*hid, OUT_CH, heads=1, concat=False) ========
    xp2 = jnp.dot(h1, w2_ref[...], preferred_element_type=f32)          # [N, OUT]
    a_s2 = jnp.sum(xp2 * asrc2_ref[...], axis=-1, keepdims=True)        # [N, 1]
    a_d2 = jnp.sum(xp2 * adst2_ref[...], axis=-1, keepdims=True)        # [N, 1]
    e2 = a_d2 + a_s2.T                                                  # [N, N]
    e2 = jnp.where(e2 > 0, e2, NEG_SLOPE * e2)
    e2 = e2 + mask2_ref[...]
    e2 = e2 - jnp.max(e2, axis=-1, keepdims=True)
    p2 = jnp.exp(e2)
    h2 = (jnp.dot(p2, xp2, preferred_element_type=f32)
          / jnp.sum(p2, axis=-1, keepdims=True)) + b2_ref[...]          # [N, OUT]

    # ========== log_softmax(dim=1) over the class logits =======================
    z = h2 - jnp.max(h2, axis=-1, keepdims=True)
    out_ref[...] = z - jnp.log(jnp.sum(jnp.exp(z), axis=-1, keepdims=True))


# ------------------------------ wrapper ----------------------------------------
def gat_model_forward(x, adj, params):
    """Eval-mode GATModel forward as one fused, fully VMEM-resident Pallas call."""
    n = x.shape[0]
    heads, hid = HEADS, HID
    f32 = jnp.float32

    # --- wrapper-side packing (pure layout plumbing, plain XLA, done once) -----
    eye_h = jnp.eye(heads, dtype=f32)
    # additive edge masks: 0 on edges (incl. self-loops), -1e9 elsewhere
    mask2 = jnp.where(adj > 0, 0.0, NEG_INF).astype(f32)                 # [N, N]
    mask1 = jnp.tile(mask2, (1, heads))                                  # [N, H*N]
    # constant selectors for the head-batched formulation
    tilemat = jnp.tile(jnp.eye(n, dtype=f32), (heads, 1))                # [H*N, N]
    blkmask = jnp.kron(eye_h, jnp.ones((n, hid), f32))                   # [H*N, H*hid]
    # attention vectors packed so each per-head reduction is a single MXU matmul
    asrc1_col = params["asrc1"].reshape(heads * hid, 1)                  # [H*hid, 1]
    adst_rep = (params["adst1"].reshape(heads * hid, 1)
                * jnp.kron(eye_h, jnp.ones((hid, n), f32)))              # [H*hid, H*N]

    inputs = (x, mask1, mask2,
              params["w1"], tilemat, blkmask, asrc1_col, adst_rep,
              params["b1"], params["w2"], params["asrc2"], params["adst2"],
              params["b2"])
    vmem = pl.BlockSpec(memory_space=pltpu.MemorySpace.VMEM)
    return pl.pallas_call(
        _gat_model_kernel,
        out_shape=jax.ShapeDtypeStruct((n, OUT_CH), jnp.float32),
        in_specs=[vmem] * len(inputs),
        out_specs=vmem,
    )(*inputs)


# ------------------------------ pure-JAX reference ------------------------------
def _reference_forward(x, adj, params):
    """Straightforward per-head JAX implementation (numerical cross-check)."""
    hp = jax.lax.Precision.HIGHEST

    def gat_layer(h, w, a_src, a_dst, bias, n_heads, out_dim, concat):
        xp = jnp.dot(h, w, precision=hp)
        outs = []
        for hd in range(n_heads):
            xh = xp[:, hd * out_dim:(hd + 1) * out_dim]
            a_s = jnp.sum(xh * a_src[hd][None, :], axis=-1, keepdims=True)
            a_d = jnp.sum(xh * a_dst[hd][None, :], axis=-1, keepdims=True)
            e = a_d + a_s.T
            e = jnp.where(e > 0, e, NEG_SLOPE * e)
            e = jnp.where(adj > 0, e, NEG_INF)
            alpha = jax.nn.softmax(e, axis=-1)
            outs.append(jnp.dot(alpha, xh, precision=hp))
        out = jnp.concatenate(outs, axis=-1) if concat else sum(outs) / n_heads
        return out + bias

    h1 = gat_layer(x, params["w1"], params["asrc1"], params["adst1"],
                   params["b1"], HEADS, HID, True)
    h1 = jax.nn.relu(h1)
    h2 = gat_layer(h1, params["w2"], params["asrc2"], params["adst2"],
                   params["b2"], 1, OUT_CH, False)
    return jax.nn.log_softmax(h2, axis=1)


# ------------------------------ param init -------------------------------------
def init_params(key):
    def glorot(k, shape):
        fan_in, fan_out = shape[0], shape[-1]
        lim = (6.0 / (fan_in + fan_out)) ** 0.5
        return jax.random.uniform(k, shape, jnp.float32, -lim, lim)

    ks = jax.random.split(key, 6)
    return {
        # layer 1: GATConv(IN_CH, HID, heads=HEADS, concat=True)
        "w1":    glorot(ks[0], (IN_CH, HEADS * HID)),
        "asrc1": glorot(ks[1], (HEADS, HID)),
        "adst1": glorot(ks[2], (HEADS, HID)),
        "b1":    jnp.zeros((1, HEADS * HID), jnp.float32),
        # layer 2: GATConv(HEADS*HID, OUT_CH, heads=1, concat=False)
        "w2":    glorot(ks[3], (HEADS * HID, OUT_CH)),
        "asrc2": glorot(ks[4], (1, OUT_CH)),
        "adst2": glorot(ks[5], (1, OUT_CH)),
        "b2":    jnp.zeros((1, OUT_CH), jnp.float32),
    }


# ------------------------------ main --------------------------------------------
if __name__ == "__main__":
    root = jax.random.PRNGKey(0)
    k_x, k_p, k_a = jax.random.split(root, 3)

    # node features
    x = jax.random.normal(k_x, (N_NODES, IN_CH), jnp.float32)

    # Deterministic random block-diagonal batch of 2 graphs (8 nodes each).
    # Bernoulli adjacency => no duplicate edges, so the dense-mask softmax is
    # exactly equivalent to PyG's edge-list softmax.  Self-loops added
    # (GATConv add_self_loops=True default) so every row has >= 1 edge.
    npg = N_NODES // N_GRAPHS
    adj = jnp.zeros((N_NODES, N_NODES), jnp.float32)
    for g in range(N_GRAPHS):
        blk = (jax.random.uniform(jax.random.fold_in(k_a, g), (npg, npg)) < 0.35)
        adj = adj.at[g * npg:(g + 1) * npg, g * npg:(g + 1) * npg].set(
            blk.astype(jnp.float32))
    adj = jnp.maximum(adj, jnp.eye(N_NODES, dtype=jnp.float32))

    params = init_params(k_p)

    out = gat_model_forward(x, adj, params)
    out = jax.block_until_ready(out)

    assert out.shape == (N_NODES, OUT_CH)
    assert bool(jnp.all(jnp.isfinite(out)))
    ref = _reference_forward(x, adj, params)
    assert bool(jnp.allclose(out, ref, atol=2e-3, rtol=2e-3)), \
        float(jnp.max(jnp.abs(out - ref)))
    print("KERNEL_OK")
</pallas_src>

<mosaic_0001>
module attributes {stable_mosaic.version = 11 : i64} {
  func.func @_gat_model_kernel(%arg0: memref<16x16xf32, #tpu.memory_space<vmem>>, %arg1: memref<16x128xf32, #tpu.memory_space<vmem>>, %arg2: memref<16x16xf32, #tpu.memory_space<vmem>>, %arg3: memref<16x64xf32, #tpu.memory_space<vmem>>, %arg4: memref<128x16xf32, #tpu.memory_space<vmem>>, %arg5: memref<128x64xf32, #tpu.memory_space<vmem>>, %arg6: memref<64x1xf32, #tpu.memory_space<vmem>>, %arg7: memref<64x128xf32, #tpu.memory_space<vmem>>, %arg8: memref<1x64xf32, #tpu.memory_space<vmem>>, %arg9: memref<64x4xf32, #tpu.memory_space<vmem>>, %arg10: memref<1x4xf32, #tpu.memory_space<vmem>>, %arg11: memref<1x4xf32, #tpu.memory_space<vmem>>, %arg12: memref<1x4xf32, #tpu.memory_space<vmem>>, %arg13: memref<16x4xf32, #tpu.memory_space<vmem>>) attributes {dimension_semantics = [], scalar_prefetch = 0 : i64, scratch_operands = 0 : i64, tpu.core_type = #tpu.core_type<tc>} {
    %c0 = arith.constant 0 : index
    %c0_0 = arith.constant 0 : index
    %0 = vector.load %arg0[%c0, %c0_0] : memref<16x16xf32, #tpu.memory_space<vmem>>, vector<16x16xf32>
    %c0_1 = arith.constant 0 : index
    %c0_2 = arith.constant 0 : index
    %1 = vector.load %arg3[%c0_1, %c0_2] : memref<16x64xf32, #tpu.memory_space<vmem>>, vector<16x64xf32>
    %cst = arith.constant dense<0.000000e+00> : vector<16x64xf32>
    %2 = tpu.matmul %0, %1, %cst {dimension_numbers = #tpu.dot_dimension_numbers<[1], [0], [0], [1], [0, 0, 1, 1], [], []>} : vector<16x16xf32>, vector<16x64xf32>, vector<16x64xf32> -> vector<16x64xf32>
    %c0_3 = arith.constant 0 : index
    %c0_4 = arith.constant 0 : index
    %3 = vector.load %arg5[%c0_3, %c0_4] : memref<128x64xf32, #tpu.memory_space<vmem>>, vector<128x64xf32>
    %c0_5 = arith.constant 0 : index
    %c0_6 = arith.constant 0 : index
    %4 = vector.load %arg4[%c0_5, %c0_6] : memref<128x16xf32, #tpu.memory_space<vmem>>, vector<128x16xf32>
    %cst_7 = arith.constant dense<0.000000e+00> : vector<128x64xf32>
    %5 = tpu.matmul %4, %2, %cst_7 {dimension_numbers = #tpu.dot_dimension_numbers<[1], [0], [0], [1], [0, 0, 1, 1], [], []>} : vector<128x16xf32>, vector<16x64xf32>, vector<128x64xf32> -> vector<128x64xf32>
    %6 = arith.mulf %5, %3 : vector<128x64xf32>
    %c0_8 = arith.constant 0 : index
    %c0_9 = arith.constant 0 : index
    %7 = vector.load %arg7[%c0_8, %c0_9] : memref<64x128xf32, #tpu.memory_space<vmem>>, vector<64x128xf32>
    %cst_10 = arith.constant dense<0.000000e+00> : vector<16x128xf32>
    %8 = tpu.matmul %2, %7, %cst_10 {dimension_numbers = #tpu.dot_dimension_numbers<[1], [0], [0], [1], [0, 0, 1, 1], [], []>} : vector<16x64xf32>, vector<64x128xf32>, vector<16x128xf32> -> vector<16x128xf32>
    %c0_11 = arith.constant 0 : index
    %c0_12 = arith.constant 0 : index
    %9 = vector.load %arg6[%c0_11, %c0_12] : memref<64x1xf32, #tpu.memory_space<vmem>>, vector<64x1xf32>
    %cst_13 = arith.constant dense<0.000000e+00> : vector<128x1xf32>
    %10 = tpu.matmul %6, %9, %cst_13 {dimension_numbers = #tpu.dot_dimension_numbers<[1], [0], [0], [1], [0, 0, 1, 1], [], []>} : vector<128x64xf32>, vector<64x1xf32>, vector<128x1xf32> -> vector<128x1xf32>
    %11 = tpu.transpose %10, [1, 0] : vector<128x1xf32> -> vector<1x128xf32>
    %12 = vector.broadcast %11 : vector<1x128xf32> to vector<16x128xf32>
    %13 = arith.addf %8, %12 : vector<16x128xf32>
    %cst_14 = arith.constant 0.000000e+00 : f32
    %14 = vector.broadcast %cst_14 : f32 to vector<16x128xf32>
    %15 = arith.cmpf ogt, %13, %14 : vector<16x128xf32>
    %cst_15 = arith.constant 2.000000e-01 : f32
    %16 = vector.broadcast %cst_15 : f32 to vector<16x128xf32>
    %17 = arith.mulf %16, %13 : vector<16x128xf32>
    %18 = arith.select %15, %13, %17 : vector<16x128xi1>, vector<16x128xf32>
    %c0_16 = arith.constant 0 : index
    %c0_17 = arith.constant 0 : index
    %19 = vector.load %arg1[%c0_16, %c0_17] : memref<16x128xf32, #tpu.memory_space<vmem>>, vector<16x128xf32>
    %20 = arith.addf %18, %19 : vector<16x128xf32>
    %cst_18 = arith.constant dense<0xFF800000> : vector<16xf32>
    %21 = vector.multi_reduction <maximumf>, %20, %cst_18 [1] : vector<16x128xf32> to vector<16xf32>
    %22 = vector.shape_cast %21 : vector<16xf32> to vector<16x1xf32>
    %23 = vector.broadcast %22 : vector<16x1xf32> to vector<16x128xf32>
    %24 = arith.subf %20, %23 : vector<16x128xf32>
    %25 = math.exp %24 : vector<16x128xf32>
    %cst_19 = arith.constant dense<0.000000e+00> : vector<16x64xf32>
    %26 = tpu.matmul %25, %6, %cst_19 {dimension_numbers = #tpu.dot_dimension_numbers<[1], [0], [0], [1], [0, 0, 1, 1], [], []>} : vector<16x128xf32>, vector<128x64xf32>, vector<16x64xf32> -> vector<16x64xf32>
    %cst_20 = arith.constant dense<0.000000e+00> : vector<16x64xf32>
    %27 = tpu.matmul %25, %3, %cst_20 {dimension_numbers = #tpu.dot_dimension_numbers<[1], [0], [0], [1], [0, 0, 1, 1], [], []>} : vector<16x128xf32>, vector<128x64xf32>, vector<16x64xf32> -> vector<16x64xf32>
    %28 = arith.divf %26, %27 : vector<16x64xf32>
    %c0_21 = arith.constant 0 : index
    %c0_22 = arith.constant 0 : index
    %29 = vector.load %arg8[%c0_21, %c0_22] : memref<1x64xf32, #tpu.memory_space<vmem>>, vector<1x64xf32>
    %30 = vector.broadcast %29 : vector<1x64xf32> to vector<16x64xf32>
    %31 = arith.addf %28, %30 : vector<16x64xf32>
    %cst_23 = arith.constant 0.000000e+00 : f32
    %32 = vector.broadcast %cst_23 : f32 to vector<16x64xf32>
    %33 = arith.maximumf %31, %32 : vector<16x64xf32>
    %c0_24 = arith.constant 0 : index
    %c0_25 = arith.constant 0 : index
    %34 = vector.load %arg9[%c0_24, %c0_25] : memref<64x4xf32, #tpu.memory_space<vmem>>, vector<64x4xf32>
    %cst_26 = arith.constant dense<0.000000e+00> : vector<16x4xf32>
    %35 = tpu.matmul %33, %34, %cst_26 {dimension_numbers = #tpu.dot_dimension_numbers<[1], [0], [0], [1], [0, 0, 1, 1], [], []>} : vector<16x64xf32>, vector<64x4xf32>, vector<16x4xf32> -> vector<16x4xf32>
    %c0_27 = arith.constant 0 : index
    %c0_28 = arith.constant 0 : index
    %36 = vector.load %arg10[%c0_27, %c0_28] : memref<1x4xf32, #tpu.memory_space<vmem>>, vector<1x4xf32>
    %37 = vector.broadcast %36 : vector<1x4xf32> to vector<16x4xf32>
    %38 = arith.mulf %35, %37 : vector<16x4xf32>
    %cst_29 = arith.constant dense<0.000000e+00> : vector<16xf32>
    %39 = vector.multi_reduction <add>, %38, %cst_29 [1] : vector<16x4xf32> to vector<16xf32>
    %40 = vector.shape_cast %39 : vector<16xf32> to vector<16x1xf32>
    %c0_30 = arith.constant 0 : index
    %c0_31 = arith.constant 0 : index
    %41 = vector.load %arg11[%c0_30, %c0_31] : memref<1x4xf32, #tpu.memory_space<vmem>>, vector<1x4xf32>
    %42 = vector.broadcast %41 : vector<1x4xf32> to vector<16x4xf32>
    %43 = arith.mulf %35, %42 : vector<16x4xf32>
    %cst_32 = arith.constant dense<0.000000e+00> : vector<16xf32>
    %44 = vector.multi_reduction <add>, %43, %cst_32 [1] : vector<16x4xf32> to vector<16xf32>
    %45 = vector.shape_cast %44 : vector<16xf32> to vector<16x1xf32>
    %46 = tpu.transpose %40, [1, 0] : vector<16x1xf32> -> vector<1x16xf32>
    %47 = vector.broadcast %45 : vector<16x1xf32> to vector<16x16xf32>
    %48 = vector.broadcast %46 : vector<1x16xf32> to vector<16x16xf32>
    %49 = arith.addf %47, %48 : vector<16x16xf32>
    %cst_33 = arith.constant 0.000000e+00 : f32
    %50 = vector.broadcast %cst_33 : f32 to vector<16x16xf32>
    %51 = arith.cmpf ogt, %49, %50 : vector<16x16xf32>
    %cst_34 = arith.constant 2.000000e-01 : f32
    %52 = vector.broadcast %cst_34 : f32 to vector<16x16xf32>
    %53 = arith.mulf %52, %49 : vector<16x16xf32>
    %54 = arith.select %51, %49, %53 : vector<16x16xi1>, vector<16x16xf32>
    %c0_35 = arith.constant 0 : index
    %c0_36 = arith.constant 0 : index
    %55 = vector.load %arg2[%c0_35, %c0_36] : memref<16x16xf32, #tpu.memory_space<vmem>>, vector<16x16xf32>
    %56 = arith.addf %54, %55 : vector<16x16xf32>
    %cst_37 = arith.constant dense<0xFF800000> : vector<16xf32>
    %57 = vector.multi_reduction <maximumf>, %56, %cst_37 [1] : vector<16x16xf32> to vector<16xf32>
    %58 = vector.shape_cast %57 : vector<16xf32> to vector<16x1xf32>
    %59 = vector.broadcast %58 : vector<16x1xf32> to vector<16x16xf32>
    %60 = arith.subf %56, %59 : vector<16x16xf32>
    %61 = math.exp %60 : vector<16x16xf32>
    %cst_38 = arith.constant dense<0.000000e+00> : vector<16x4xf32>
    %62 = tpu.matmul %61, %35, %cst_38 {dimension_numbers = #tpu.dot_dimension_numbers<[1], [0], [0], [1], [0, 0, 1, 1], [], []>} : vector<16x16xf32>, vector<16x4xf32>, vector<16x4xf32> -> vector<16x4xf32>
    %cst_39 = arith.constant dense<0.000000e+00> : vector<16xf32>
    %63 = vector.multi_reduction <add>, %61, %cst_39 [1] : vector<16x16xf32> to vector<16xf32>
    %64 = vector.shape_cast %63 : vector<16xf32> to vector<16x1xf32>
    %65 = vector.broadcast %64 : vector<16x1xf32> to vector<16x4xf32>
    %66 = arith.divf %62, %65 : vector<16x4xf32>
    %c0_40 = arith.constant 0 : index
    %c0_41 = arith.constant 0 : index
    %67 = vector.load %arg12[%c0_40, %c0_41] : memref<1x4xf32, #tpu.memory_space<vmem>>, vector<1x4xf32>
    %68 = vector.broadcast %67 : vector<1x4xf32> to vector<16x4xf32>
    %69 = arith.addf %66, %68 : vector<16x4xf32>
    %cst_42 = arith.constant dense<0xFF800000> : vector<16xf32>
    %70 = vector.multi_reduction <maximumf>, %69, %cst_42 [1] : vector<16x4xf32> to vector<16xf32>
    %71 = vector.shape_cast %70 : vector<16xf32> to vector<16x1xf32>
    %72 = vector.broadcast %71 : vector<16x1xf32> to vector<16x4xf32>
    %73 = arith.subf %69, %72 : vector<16x4xf32>
    %74 = math.exp %73 : vector<16x4xf32>
    %cst_43 = arith.constant dense<0.000000e+00> : vector<16xf32>
    %75 = vector.multi_reduction <add>, %74, %cst_43 [1] : vector<16x4xf32> to vector<16xf32>
    %76 = vector.shape_cast %75 : vector<16xf32> to vector<16x1xf32>
    %77 = math.log %76 : vector<16x1xf32>
    %78 = vector.broadcast %77 : vector<16x1xf32> to vector<16x4xf32>
    %79 = arith.subf %73, %78 : vector<16x4xf32>
    %c0_44 = arith.constant 0 : index
    %c0_45 = arith.constant 0 : index
    %80 = vector.load %arg13[%c0_44, %c0_45] : memref<16x4xf32, #tpu.memory_space<vmem>>, vector<16x4xf32>
    tpu.vector_store %arg13[%c0_44, %c0_45], %79 {strides = array<i32>} : memref<16x4xf32, #tpu.memory_space<vmem>>, vector<16x4xf32>,
    return
  }
}

</mosaic_0001>

<llo_original>
// kernel: tpu_custom_call.1
$region0: #{tpu_custom_call.1}
  #allocation0 [shape = 'u32[]', space=smem, size = 0x4, offset = 0x4, fixed_abs, tag = 'smem constant byte address 0x4 - core index']
  #allocation1 [shape = 'u32[72,128]{1,0:T(1,128)}', space=vmem, size = 0x9000, scoped, tag = 'internal scratch']
  %s0 = inlined_call_operand.vmem [shape: f32[16,16], index: 0, kind: input, shape index: {}]
  %s1 = inlined_call_operand.vmem [shape: f32[16,128], index: 1, kind: input, shape index: {}]
  %s2 = inlined_call_operand.vmem [shape: f32[16,16], index: 2, kind: input, shape index: {}]
  %s3 = inlined_call_operand.vmem [shape: f32[16,64], index: 3, kind: input, shape index: {}]
  %s4 = inlined_call_operand.vmem [shape: f32[128,16], index: 4, kind: input, shape index: {}]
  %s5 = inlined_call_operand.vmem [shape: f32[128,64], index: 5, kind: input, shape index: {}]
  %s6 = inlined_call_operand.vmem [shape: f32[64,1], index: 6, kind: input, shape index: {}]
  %s7 = inlined_call_operand.vmem [shape: f32[64,128], index: 7, kind: input, shape index: {}]
  %s8 = inlined_call_operand.vmem [shape: f32[1,64], index: 8, kind: input, shape index: {}]
  %s9 = inlined_call_operand.vmem [shape: f32[64,4], index: 9, kind: input, shape index: {}]
  %s10 = inlined_call_operand.vmem [shape: f32[1,4], index: 10, kind: input, shape index: {}]
  %s11 = inlined_call_operand.vmem [shape: f32[1,4], index: 11, kind: input, shape index: {}]
  %s12 = inlined_call_operand.vmem [shape: f32[1,4], index: 12, kind: input, shape index: {}]
  %s13 = inlined_call_operand.vmem [shape: f32[16,4], index: 13, kind: output, shape index: {}]
  %s14 = sld [smem:[#allocation0]]
  $region62: #{tpu_custom_call.1} parent=0
    _
  %s16 = ssub.s32 1, %s14
  %s17 = scalar_select 0, %s16, %s14
  // Predicated region
  $region2: #{tpu_custom_call.1} parent=0 // pred_check
    _
  $region3: #{tpu_custom_call.1} parent=0 // pred_check_branch
    %19 = sbr.rel (0) target = $region5
  $region4: #{tpu_custom_call.1} parent=0 // pred_region
    _
  $region5: #{tpu_custom_call.1} parent=0 // pred_fallthru
    _
  // Predicated region
  $region6: #{tpu_custom_call.1} parent=0 // pred_check
    _
  $region7: #{tpu_custom_call.1} parent=0 // pred_check_branch
    %21 = sbr.rel (0) target = $region9
  $region8: #{tpu_custom_call.1} parent=0 // pred_region
    _
  $region9: #{tpu_custom_call.1} parent=0 // pred_fallthru
    _
  // Predicated region
  $region10: #{tpu_custom_call.1} parent=0 // pred_check
    _
  $region11: #{tpu_custom_call.1} parent=0 // pred_check_branch
    %23 = sbr.rel (0) target = $region13
  $region12: #{tpu_custom_call.1} parent=0 // pred_region
    _
  $region13: #{tpu_custom_call.1} parent=0 // pred_fallthru
    _
  // Predicated region
  $region14: #{tpu_custom_call.1} parent=0 // pred_check
    _
  $region15: #{tpu_custom_call.1} parent=0 // pred_check_branch
    %25 = sbr.rel (0) target = $region17
  $region16: #{tpu_custom_call.1} parent=0 // pred_region
    _
  $region17: #{tpu_custom_call.1} parent=0 // pred_fallthru
    _
  // Predicated region
  $region18: #{tpu_custom_call.1} parent=0 // pred_check
    _
  $region19: #{tpu_custom_call.1} parent=0 // pred_check_branch
    %27 = sbr.rel (0) target = $region21
  $region20: #{tpu_custom_call.1} parent=0 // pred_region
    _
  $region21: #{tpu_custom_call.1} parent=0 // pred_fallthru
    _
  // Predicated region
  $region22: #{tpu_custom_call.1} parent=0 // pred_check
    _
  $region23: #{tpu_custom_call.1} parent=0 // pred_check_branch
    %29 = sbr.rel (0) target = $region25
  $region24: #{tpu_custom_call.1} parent=0 // pred_region
    _
  $region25: #{tpu_custom_call.1} parent=0 // pred_fallthru
    _
  // Predicated region
  $region26: #{tpu_custom_call.1} parent=0 // pred_check
    _
  $region27: #{tpu_custom_call.1} parent=0 // pred_check_branch
    %31 = sbr.rel (0) target = $region29
  $region28: #{tpu_custom_call.1} parent=0 // pred_region
    _
  $region29: #{tpu_custom_call.1} parent=0 // pred_fallthru
    _
  // Predicated region
  $region30: #{tpu_custom_call.1} parent=0 // pred_check
    _
  $region31: #{tpu_custom_call.1} parent=0 // pred_check_branch
    %33 = sbr.rel (0) target = $region33
  $region32: #{tpu_custom_call.1} parent=0 // pred_region
    _
  $region33: #{tpu_custom_call.1} parent=0 // pred_fallthru
    _
  // Predicated region
  $region34: #{tpu_custom_call.1} parent=0 // pred_check
    _
  $region35: #{tpu_custom_call.1} parent=0 // pred_check_branch
    %35 = sbr.rel (0) target = $region37
  $region36: #{tpu_custom_call.1} parent=0 // pred_region
    _
  $region37: #{tpu_custom_call.1} parent=0 // pred_fallthru
    _
  // Predicated region
  $region38: #{tpu_custom_call.1} parent=0 // pred_check
    _
  $region39: #{tpu_custom_call.1} parent=0 // pred_check_branch
    %37 = sbr.rel (0) target = $region41
  $region40: #{tpu_custom_call.1} parent=0 // pred_region
    _
  $region41: #{tpu_custom_call.1} parent=0 // pred_fallthru
    _
  // Predicated region
  $region42: #{tpu_custom_call.1} parent=0 // pred_check
    _
  $region43: #{tpu_custom_call.1} parent=0 // pred_check_branch
    %39 = sbr.rel (0) target = $region45
  $region44: #{tpu_custom_call.1} parent=0 // pred_region
    _
  $region45: #{tpu_custom_call.1} parent=0 // pred_fallthru
    _
  // Predicated region
  $region46: #{tpu_custom_call.1} parent=0 // pred_check
    _
  $region47: #{tpu_custom_call.1} parent=0 // pred_check_branch
    %41 = sbr.rel (0) target = $region49
  $region48: #{tpu_custom_call.1} parent=0 // pred_region
    _
  $region49: #{tpu_custom_call.1} parent=0 // pred_fallthru
    _
  // Predicated region
  $region50: #{tpu_custom_call.1} parent=0 // pred_check
    _
  $region51: #{tpu_custom_call.1} parent=0 // pred_check_branch
    %43 = sbr.rel (0) target = $region53
  $region52: #{tpu_custom_call.1} parent=0 // pred_region
    _
  $region53: #{tpu_custom_call.1} parent=0 // pred_fallthru
    _
  %v44 = vld [vmem:[%s0] sm:$0xff]
  %v45 = vld [vmem:[%s0 + $0x8] sm:$0xff]
  %v46 = vld [vmem:[%s3] sm:$0xff]
  %v47 = vld [vmem:[%s3 + $0x8] sm:$0xff]
  %vm48 = vcmask 130048
  %v50 = vsel %vm48, %v44, 0
  %v53 = vsel %vm48, %v45, 0
  %55 = vmatpush.msra.mxu0 0.0
  %56 = vmatpush.msra.mxu0 0.0
  %57 = vmatpush.msra.mxu0 0.0
  %58 = vmatpush.msra.mxu0 0.0
  %59 = vmatpush.msra.mxu0 0.0
  %60 = vmatpush.msra.mxu0 0.0
  %61 = vmatpush.msra.mxu0 0.0
  %62 = vmatpush.msra.mxu0 0.0
  %63 = vmatpush.msra.mxu0 0.0
  %64 = vmatpush.msra.mxu0 0.0
  %65 = vmatpush.msra.mxu0 0.0
  %66 = vmatpush.msra.mxu0 0.0
  %67 = vmatpush.msra.mxu0 0.0
  %68 = vmatpush.msra.mxu0 0.0
  %69 = vmatpush.msra.mxu0 %v47
  %70 = vmatpush.msra.mxu0 %v46
  %71 = vmatmul.f32.gmra.mxu0 %v50
  %v72 = vpop.f32.mrf.mxu0
  %v73 = vadd.f32 0.0, %v72
  %74 = vmatmul.f32.gmra.mxu0 %v53
  %v75 = vpop.f32.mrf.mxu0
  %v76 = vadd.f32 0.0, %v75
  %77 = vdwg.mxu0
  %v78 = vld [vmem:[%s5] sm:$0xff]
  %v79 = vld [vmem:[%s5 + $0x8] sm:$0xff]
  %v80 = vld [vmem:[%s5 + $0x10] sm:$0xff]
  %v81 = vld [vmem:[%s5 + $0x18] sm:$0xff]
  %v82 = vld [vmem:[%s5 + $0x20] sm:$0xff]
  %v83 = vld [vmem:[%s5 + $0x28] sm:$0xff]
  %v84 = vld [vmem:[%s5 + $0x30] sm:$0xff]
  %v85 = vld [vmem:[%s5 + $0x38] sm:$0xff]
  %v86 = vld [vmem:[%s5 + $0x40] sm:$0xff]
  %v87 = vld [vmem:[%s5 + $0x48] sm:$0xff]
  %v88 = vld [vmem:[%s5 + $0x50] sm:$0xff]
  %v89 = vld [vmem:[%s5 + $0x58] sm:$0xff]
  %v90 = vld [vmem:[%s5 + $0x60] sm:$0xff]
  %v91 = vld [vmem:[%s5 + $0x68] sm:$0xff]
  %v92 = vld [vmem:[%s5 + $0x70] sm:$0xff]
  %v93 = vld [vmem:[%s5 + $0x78] sm:$0xff]
  %v94 = vld [vmem:[%s4] sm:$0xff]
  %v95 = vld [vmem:[%s4 + $0x8] sm:$0xff]
  %v96 = vld [vmem:[%s4 + $0x10] sm:$0xff]
  %v97 = vld [vmem:[%s4 + $0x18] sm:$0xff]
  %v98 = vld [vmem:[%s4 + $0x20] sm:$0xff]
  %v99 = vld [vmem:[%s4 + $0x28] sm:$0xff]
  %v100 = vld [vmem:[%s4 + $0x30] sm:$0xff]
  %v101 = vld [vmem:[%s4 + $0x38] sm:$0xff]
  %v102 = vld [vmem:[%s4 + $0x40] sm:$0xff]
  %v103 = vld [vmem:[%s4 + $0x48] sm:$0xff]
  %v104 = vld [vmem:[%s4 + $0x50] sm:$0xff]
  %v105 = vld [vmem:[%s4 + $0x58] sm:$0xff]
  %v106 = vld [vmem:[%s4 + $0x60] sm:$0xff]
  %v107 = vld [vmem:[%s4 + $0x68] sm:$0xff]
  %v108 = vld [vmem:[%s4 + $0x70] sm:$0xff]
  %v109 = vld [vmem:[%s4 + $0x78] sm:$0xff]
  %v111 = vsel %vm48, %v94, 0
  %v114 = vsel %vm48, %v95, 0
  %v117 = vsel %vm48, %v96, 0
  %v120 = vsel %vm48, %v97, 0
  %v123 = vsel %vm48, %v98, 0
  %v126 = vsel %vm48, %v99, 0
  %v129 = vsel %vm48, %v100, 0
  %v132 = vsel %vm48, %v101, 0
  %v135 = vsel %vm48, %v102, 0
  %v138 = vsel %vm48, %v103, 0
  %v141 = vsel %vm48, %v104, 0
  %v144 = vsel %vm48, %v105, 0
  %v147 = vsel %vm48, %v106, 0
  %v150 = vsel %vm48, %v107, 0
  %v153 = vsel %vm48, %v108, 0
  %v156 = vsel %vm48, %v109, 0
  %158 = vmatpush.msra.mxu0 0.0
  %159 = vmatpush.msra.mxu0 0.0
  %160 = vmatpush.msra.mxu0 0.0
  %161 = vmatpush.msra.mxu0 0.0
  %162 = vmatpush.msra.mxu0 0.0
  %163 = vmatpush.msra.mxu0 0.0
  %164 = vmatpush.msra.mxu0 0.0
  %165 = vmatpush.msra.mxu0 0.0
  %166 = vmatpush.msra.mxu0 0.0
  %167 = vmatpush.msra.mxu0 0.0
  %168 = vmatpush.msra.mxu0 0.0
  %169 = vmatpush.msra.mxu0 0.0
  %170 = vmatpush.msra.mxu0 0.0
  %171 = vmatpush.msra.mxu0 0.0
  %172 = vmatpush.msra.mxu0 %v76
  %173 = vmatpush.msra.mxu0 %v73
  %174 = vmatmul.f32.gmra.mxu0 %v111
  %v175 = vpop.f32.mrf.mxu0
  %v176 = vadd.f32 0.0, %v175
  %177 = vmatmul.f32.gmra.mxu0 %v114
  %v178 = vpop.f32.mrf.mxu0
  %v179 = vadd.f32 0.0, %v178
  %180 = vmatmul.f32.gmra.mxu0 %v117
  %v181 = vpop.f32.mrf.mxu0
  %v182 = vadd.f32 0.0, %v181
  %183 = vmatmul.f32.gmra.mxu0 %v120
  %v184 = vpop.f32.mrf.mxu0
  %v185 = vadd.f32 0.0, %v184
  %186 = vmatmul.f32.gmra.mxu0 %v123
  %v187 = vpop.f32.mrf.mxu0
  %v188 = vadd.f32 0.0, %v187
  %189 = vmatmul.f32.gmra.mxu0 %v126
  %v190 = vpop.f32.mrf.mxu0
  %v191 = vadd.f32 0.0, %v190
  %192 = vmatmul.f32.gmra.mxu0 %v129
  %v193 = vpop.f32.mrf.mxu0
  %v194 = vadd.f32 0.0, %v193
  %195 = vmatmul.f32.gmra.mxu0 %v132
  %v196 = vpop.f32.mrf.mxu0
  %v197 = vadd.f32 0.0, %v196
  %198 = vmatmul.f32.gmra.mxu0 %v135
  %v199 = vpop.f32.mrf.mxu0
  %v200 = vadd.f32 0.0, %v199
  %201 = vmatmul.f32.gmra.mxu0 %v138
  %v202 = vpop.f32.mrf.mxu0
  %v203 = vadd.f32 0.0, %v202
  %204 = vmatmul.f32.gmra.mxu0 %v141
  %v205 = vpop.f32.mrf.mxu0
  %v206 = vadd.f32 0.0, %v205
  %207 = vmatmul.f32.gmra.mxu0 %v144
  %v208 = vpop.f32.mrf.mxu0
  %v209 = vadd.f32 0.0, %v208
  %210 = vmatmul.f32.gmra.mxu0 %v147
  %v211 = vpop.f32.mrf.mxu0
  %v212 = vadd.f32 0.0, %v211
  %213 = vmatmul.f32.gmra.mxu0 %v150
  %v214 = vpop.f32.mrf.mxu0
  %v215 = vadd.f32 0.0, %v214
  %216 = vmatmul.f32.gmra.mxu0 %v153
  %v217 = vpop.f32.mrf.mxu0
  %v218 = vadd.f32 0.0, %v217
  %219 = vmatmul.f32.gmra.mxu0 %v156
  %v220 = vpop.f32.mrf.mxu0
  %v221 = vadd.f32 0.0, %v220
  %222 = vdwg.mxu0
  %v223 = vmul.f32 %v176, %v78
  %v224 = vmul.f32 %v179, %v79
  %v225 = vmul.f32 %v182, %v80
  %v226 = vmul.f32 %v185, %v81
  %v227 = vmul.f32 %v188, %v82
  %v228 = vmul.f32 %v191, %v83
  %v229 = vmul.f32 %v194, %v84
  %v230 = vmul.f32 %v197, %v85
  %v231 = vmul.f32 %v200, %v86
  %v232 = vmul.f32 %v203, %v87
  %v233 = vmul.f32 %v206, %v88
  %v234 = vmul.f32 %v209, %v89
  %v235 = vmul.f32 %v212, %v90
  %v236 = vmul.f32 %v215, %v91
  %v237 = vmul.f32 %v218, %v92
  %v238 = vmul.f32 %v221, %v93
  %v239 = vld [vmem:[%s7] sm:$0xff]
  %v240 = vld [vmem:[%s7 + $0x8] sm:$0xff]
  %v241 = vld [vmem:[%s7 + $0x10] sm:$0xff]
  %v242 = vld [vmem:[%s7 + $0x18] sm:$0xff]
  %v243 = vld [vmem:[%s7 + $0x20] sm:$0xff]
  %v244 = vld [vmem:[%s7 + $0x28] sm:$0xff]
  %v245 = vld [vmem:[%s7 + $0x30] sm:$0xff]
  %v246 = vld [vmem:[%s7 + $0x38] sm:$0xff]
  %v247 = vld [vmem:[%s6] sm:$0xff]
  %v248 = vld [vmem:[%s6 + $0x8] sm:$0xff]
  %v249 = vld [vmem:[%s6 + $0x10] sm:$0xff]
  %v250 = vld [vmem:[%s6 + $0x18] sm:$0xff]
  %v251 = vld [vmem:[%s6 + $0x20] sm:$0xff]
  %v252 = vld [vmem:[%s6 + $0x28] sm:$0xff]
  %v253 = vld [vmem:[%s6 + $0x30] sm:$0xff]
  %v254 = vld [vmem:[%s6 + $0x38] sm:$0xff]
  %vm255 = vcmask 523264
  %v257 = vsel %vm255, %v223, 0
  %v260 = vsel %vm255, %v224, 0
  %v263 = vsel %vm255, %v225, 0
  %v266 = vsel %vm255, %v226, 0
  %v269 = vsel %vm255, %v227, 0
  %v272 = vsel %vm255, %v228, 0
  %v275 = vsel %vm255, %v229, 0
  %v278 = vsel %vm255, %v230, 0
  %v281 = vsel %vm255, %v231, 0
  %v284 = vsel %vm255, %v232, 0
  %v287 = vsel %vm255, %v233, 0
  %v290 = vsel %vm255, %v234, 0
  %v293 = vsel %vm255, %v235, 0
  %v296 = vsel %vm255, %v236, 0
  %v299 = vsel %vm255, %v237, 0
  %v302 = vsel %vm255, %v238, 0
  %304 = vmatpush.msra.mxu0 0.0
  %305 = vmatpush.msra.mxu0 0.0
  %306 = vmatpush.msra.mxu0 0.0
  %307 = vmatpush.msra.mxu0 0.0
  %308 = vmatpush.msra.mxu0 0.0
  %309 = vmatpush.msra.mxu0 0.0
  %310 = vmatpush.msra.mxu0 0.0
  %311 = vmatpush.msra.mxu0 0.0
  %312 = vmatpush.msra.mxu0 %v254
  %313 = vmatpush.msra.mxu0 %v253
  %314 = vmatpush.msra.mxu0 %v252
  %315 = vmatpush.msra.mxu0 %v251
  %316 = vmatpush.msra.mxu0 %v250
  %317 = vmatpush.msra.mxu0 %v249
  %318 = vmatpush.msra.mxu0 %v248
  %319 = vmatpush.msra.mxu0 %v247
  %320 = vmatmul.f32.gmra.mxu0 %v257
  %v321 = vpop.f32.mrf.mxu0
  %v322 = vadd.f32 0.0, %v321
  %323 = vmatmul.f32.gmra.mxu0 %v260
  %v324 = vpop.f32.mrf.mxu0
  %v325 = vadd.f32 0.0, %v324
  %326 = vmatmul.f32.gmra.mxu0 %v263
  %v327 = vpop.f32.mrf.mxu0
  %v328 = vadd.f32 0.0, %v327
  %329 = vmatmul.f32.gmra.mxu0 %v266
  %v330 = vpop.f32.mrf.mxu0
  %v331 = vadd.f32 0.0, %v330
  %332 = vmatmul.f32.gmra.mxu0 %v269
  %v333 = vpop.f32.mrf.mxu0
  %v334 = vadd.f32 0.0, %v333
  %335 = vmatmul.f32.gmra.mxu0 %v272
  %v336 = vpop.f32.mrf.mxu0
  %v337 = vadd.f32 0.0, %v336
  %338 = vmatmul.f32.gmra.mxu0 %v275
  %v339 = vpop.f32.mrf.mxu0
  %v340 = vadd.f32 0.0, %v339
  %341 = vmatmul.f32.gmra.mxu0 %v278
  %v342 = vpop.f32.mrf.mxu0
  %v343 = vadd.f32 0.0, %v342
  %344 = vmatmul.f32.gmra.mxu0 %v281
  %v345 = vpop.f32.mrf.mxu0
  %v346 = vadd.f32 0.0, %v345
  %347 = vmatmul.f32.gmra.mxu0 %v284
  %v348 = vpop.f32.mrf.mxu0
  %v349 = vadd.f32 0.0, %v348
  %350 = vmatmul.f32.gmra.mxu0 %v287
  %v351 = vpop.f32.mrf.mxu0
  %v352 = vadd.f32 0.0, %v351
  %353 = vmatmul.f32.gmra.mxu0 %v290
  %v354 = vpop.f32.mrf.mxu0
  %v355 = vadd.f32 0.0, %v354
  %356 = vmatmul.f32.gmra.mxu0 %v293
  %v357 = vpop.f32.mrf.mxu0
  %v358 = vadd.f32 0.0, %v357
  %359 = vmatmul.f32.gmra.mxu0 %v296
  %v360 = vpop.f32.mrf.mxu0
  %v361 = vadd.f32 0.0, %v360
  %362 = vmatmul.f32.gmra.mxu0 %v299
  %v363 = vpop.f32.mrf.mxu0
  %v364 = vadd.f32 0.0, %v363
  %365 = vmatmul.f32.gmra.mxu0 %v302
  %v366 = vpop.f32.mrf.mxu0
  %v367 = vadd.f32 0.0, %v366
  %368 = vdwg.mxu0
  %369 = vxpose.xlu0.b32.start [1/16] %v322, 128
  %370 = vxpose.xlu0.b32.cont [2/16] %v325, 128
  %371 = vxpose.xlu0.b32.cont [3/16] %v328, 128
  %372 = vxpose.xlu0.b32.cont [4/16] %v331, 128
  %373 = vxpose.xlu0.b32.cont [5/16] %v334, 128
  %374 = vxpose.xlu0.b32.cont [6/16] %v337, 128
  %375 = vxpose.xlu0.b32.cont [7/16] %v340, 128
  %376 = vxpose.xlu0.b32.cont [8/16] %v343, 128
  %377 = vxpose.xlu0.b32.cont [9/16] %v346, 128
  %378 = vxpose.xlu0.b32.cont [10/16] %v349, 128
  %379 = vxpose.xlu0.b32.cont [11/16] %v352, 128
  %380 = vxpose.xlu0.b32.cont [12/16] %v355, 128
  %381 = vxpose.xlu0.b32.cont [13/16] %v358, 128
  %382 = vxpose.xlu0.b32.cont [14/16] %v361, 128
  %383 = vxpose.xlu0.b32.cont [15/16] %v364, 128
  %384 = vxpose.xlu0.b32.end [16/16] %v367, 128
  %v385 = vpop.trf.xlu0
  %v386 = vpop.trf.xlu0
  %v387 = vpop.trf.xlu0
  %v388 = vpop.trf.xlu0
  %v389 = vpop.trf.xlu0
  %v390 = vpop.trf.xlu0
  %v391 = vpop.trf.xlu0
  %v392 = vpop.trf.xlu0
  %v393 = vpop.trf.xlu0
  %v394 = vpop.trf.xlu0
  %v395 = vpop.trf.xlu0
  %v396 = vpop.trf.xlu0
  %v397 = vpop.trf.xlu0
  %v398 = vpop.trf.xlu0
  %v399 = vpop.trf.xlu0
  %v400 = vpop.trf.xlu0
  %v401 = vperm.slane %v385, 0
  %v403 = vsel %vm255, %v73, 0
  %v406 = vsel %vm255, %v76, 0
  %408 = vmatpush.msra.mxu0 0.0
  %409 = vmatpush.msra.mxu0 0.0
  %410 = vmatpush.msra.mxu0 0.0
  %411 = vmatpush.msra.mxu0 0.0
  %412 = vmatpush.msra.mxu0 0.0
  %413 = vmatpush.msra.mxu0 0.0
  %414 = vmatpush.msra.mxu0 0.0
  %415 = vmatpush.msra.mxu0 0.0
  %416 = vmatpush.msra.mxu0 %v246
  %417 = vmatpush.msra.mxu0 %v245
  %418 = vmatpush.msra.mxu0 %v244
  %419 = vmatpush.msra.mxu0 %v243
  %420 = vmatpush.msra.mxu0 %v242
  %421 = vmatpush.msra.mxu0 %v241
  %422 = vmatpush.msra.mxu0 %v240
  %423 = vmatpush.msra.mxu0 %v239
  %424 = vmatmul.f32.gmra.mxu0 %v403
  %v425 = vpop.f32.mrf.mxu0
  %v426 = vadd.f32 %v401, %v425
  %427 = vmatmul.f32.gmra.mxu0 %v406
  %v428 = vpop.f32.mrf.mxu0
  %v429 = vadd.f32 %v401, %v428
  %430 = vdwg.mxu0
  %vm431 = vcmp.gt.f32.partialorder %v426, 0.0
  %vm432 = vcmp.gt.f32.partialorder %v429, 0.0
  %v433 = vmul.f32 %v426, 0.2
  %v434 = vmul.f32 %v429, 0.2
  %v435 = vsel %vm431, %v426, %v433
  %v436 = vsel %vm432, %v429, %v434
  %v437 = vld [vmem:[%s1] sm:$0xff]
  %v438 = vld [vmem:[%s1 + $0x8] sm:$0xff]
  %v439 = vadd.f32 %v435, %v437
  %v440 = vadd.f32 %v436, %v438
  %441 = vmax.xlane.f32.xlu0 %v439
  %v442 = vpop.xlane.xlu0 %441
  %443 = vmax.xlane.f32.xlu0 %v440
  %v444 = vpop.xlane.xlu0 %443
  %v445 = vsub.f32 %v439, %v442
  %v446 = vsub.f32 %v440, %v444
  %v447 = vmul.f32 %v445, 1.442695
  %v448 = vpow.pop %v447
  %v449 = vmul.f32 %v446, 1.442695
  %v450 = vpow.pop %v449
  %451 = vmatpush.msra.mxu0 %v238
  %452 = vmatpush.msra.mxu0 %v237
  %453 = vmatpush.msra.mxu0 %v236
  %454 = vmatpush.msra.mxu0 %v235
  %455 = vmatpush.msra.mxu0 %v234
  %456 = vmatpush.msra.mxu0 %v233
  %457 = vmatpush.msra.mxu0 %v232
  %458 = vmatpush.msra.mxu0 %v231
  %459 = vmatpush.msra.mxu0 %v230
  %460 = vmatpush.msra.mxu0 %v229
  %461 = vmatpush.msra.mxu0 %v228
  %462 = vmatpush.msra.mxu0 %v227
  %463 = vmatpush.msra.mxu0 %v226
  %464 = vmatpush.msra.mxu0 %v225
  %465 = vmatpush.msra.mxu0 %v224
  %466 = vmatpush.msra.mxu0 %v223
  %467 = vmatmul.f32.gmra.mxu0 %v448
  %v468 = vpop.f32.mrf.mxu0
  %v469 = vadd.f32 0.0, %v468
  %470 = vmatmul.f32.gmra.mxu0 %v450
  %v471 = vpop.f32.mrf.mxu0
  %v472 = vadd.f32 0.0, %v471
  %473 = vdwg.mxu0
  %474 = vmatpush.msra.mxu0 %v93
  %475 = vmatpush.msra.mxu0 %v92
  %476 = vmatpush.msra.mxu0 %v91
  %477 = vmatpush.msra.mxu0 %v90
  %478 = vmatpush.msra.mxu0 %v89
  %479 = vmatpush.msra.mxu0 %v88
  %480 = vmatpush.msra.mxu0 %v87
  %481 = vmatpush.msra.mxu0 %v86
  %482 = vmatpush.msra.mxu0 %v85
  %483 = vmatpush.msra.mxu0 %v84
  %484 = vmatpush.msra.mxu0 %v83
  %485 = vmatpush.msra.mxu0 %v82
  %486 = vmatpush.msra.mxu0 %v81
  %487 = vmatpush.msra.mxu0 %v80
  %488 = vmatpush.msra.mxu0 %v79
  %489 = vmatpush.msra.mxu0 %v78
  %490 = vmatmul.f32.gmra.mxu0 %v448
  %v491 = vpop.f32.mrf.mxu0
  %v492 = vadd.f32 0.0, %v491
  %493 = vmatmul.f32.gmra.mxu0 %v450
  %v494 = vpop.f32.mrf.mxu0
  %v495 = vadd.f32 0.0, %v494
  %496 = vdwg.mxu0
  %v497 = vrcp.pop %v492
  %v498 = vmul.f32 %v492, %v497
  %v499 = vsub.f32 1.0, %v498
  %v500 = vmul.f32 %v497, %v499
  %v501 = vadd.f32 %v497, %v500
  %vm502 = vweird.f32 %v492
  %vm503 = vweird.f32 %v497
  %vm504 = vmor %vm502, %vm503
  %v505 = vsel %vm504, %v497, %v501
  %v506 = vand.u32 2147483647, %v492
  %vm507 = vcmp.eq.f32.partialorder %v506, 8.507059e+37
  %v508 = vand.u32 %v492, 2147483648
  %v509 = vor.u32 1.1754944e-38, %v508
  %v510 = vsel %vm507, %v509, %v505
  %v511 = vmul.f32 %v469, %v510
  %v512 = vrcp.pop %v495
  %v513 = vmul.f32 %v495, %v512
  %v514 = vsub.f32 1.0, %v513
  %v515 = vmul.f32 %v512, %v514
  %v516 = vadd.f32 %v512, %v515
  %vm517 = vweird.f32 %v495
  %vm518 = vweird.f32 %v512
  %vm519 = vmor %vm517, %vm518
  %v520 = vsel %vm519, %v512, %v516
  %v521 = vand.u32 2147483647, %v495
  %vm522 = vcmp.eq.f32.partialorder %v521, 8.507059e+37
  %v523 = vand.u32 %v495, 2147483648
  %v524 = vor.u32 1.1754944e-38, %v523
  %v525 = vsel %vm522, %v524, %v520
  %v526 = vmul.f32 %v472, %v525
  %v527 = vld [vmem:[%s8] sm:$0x1]
  %v529 = vperm.slane %v527, 0
  %v531 = vadd.f32 %v511, %v529
  %v532 = vadd.f32 %v526, %v529
  %v533 = vmax.f32 %v531, 0.0
  %v534 = vmax.f32 %v532, 0.0
  %v535 = vld [vmem:[%s9] sm:$0xff]
  %v536 = vld [vmem:[%s9 + $0x8] sm:$0xff]
  %v537 = vld [vmem:[%s9 + $0x10] sm:$0xff]
  %v538 = vld [vmem:[%s9 + $0x18] sm:$0xff]
  %v539 = vld [vmem:[%s9 + $0x20] sm:$0xff]
  %v540 = vld [vmem:[%s9 + $0x28] sm:$0xff]
  %v541 = vld [vmem:[%s9 + $0x30] sm:$0xff]
  %v542 = vld [vmem:[%s9 + $0x38] sm:$0xff]
  %v544 = vsel %vm255, %v533, 0
  %v547 = vsel %vm255, %v534, 0
  %549 = vmatpush.msra.mxu0 0.0
  %550 = vmatpush.msra.mxu0 0.0
  %551 = vmatpush.msra.mxu0 0.0
  %552 = vmatpush.msra.mxu0 0.0
  %553 = vmatpush.msra.mxu0 0.0
  %554 = vmatpush.msra.mxu0 0.0
  %555 = vmatpush.msra.mxu0 0.0
  %556 = vmatpush.msra.mxu0 0.0
  %557 = vmatpush.msra.mxu0 %v542
  %558 = vmatpush.msra.mxu0 %v541
  %559 = vmatpush.msra.mxu0 %v540
  %560 = vmatpush.msra.mxu0 %v539
  %561 = vmatpush.msra.mxu0 %v538
  %562 = vmatpush.msra.mxu0 %v537
  %563 = vmatpush.msra.mxu0 %v536
  %564 = vmatpush.msra.mxu0 %v535
  %565 = vmatmul.f32.gmra.mxu0 %v544
  %v566 = vpop.f32.mrf.mxu0
  %v567 = vadd.f32 0.0, %v566
  %568 = vmatmul.f32.gmra.mxu0 %v547
  %v569 = vpop.f32.mrf.mxu0
  %v570 = vadd.f32 0.0, %v569
  %571 = vdwg.mxu0
  %v572 = vld [vmem:[%s10] sm:$0x1]
  %v574 = vperm.slane %v572, 0
  %v576 = vmul.f32 %v567, %v574
  %v577 = vmul.f32 %v570, %v574
  %vm578 = vcmask 31744
  %v579 = vsel %vm578, %v576, 0.0
  %580 = vadd.xlane.f32.xlu0 %v579
  %v581 = vpop.xlane.xlu0 %580
  %v582 = vsel %vm578, %v577, 0.0
  %583 = vadd.xlane.f32.xlu0 %v582
  %v584 = vpop.xlane.xlu0 %583
  %v585 = vld [vmem:[%s11] sm:$0x1]
  %v587 = vperm.slane %v585, 0
  %v589 = vmul.f32 %v567, %v587
  %v590 = vmul.f32 %v570, %v587
  %v591 = vsel %vm578, %v589, 0.0
  %592 = vadd.xlane.f32.xlu0 %v591
  %v593 = vpop.xlane.xlu0 %592
  %v594 = vsel %vm578, %v590, 0.0
  %595 = vadd.xlane.f32.xlu0 %v594
  %v596 = vpop.xlane.xlu0 %595
  %597 = vxpose.xlu0.b32.start [1/16] %v581, 128
  %598 = vxpose.xlu0.b32.cont [2/16] %v584, 128
  %599 = vxpose.xlu0.b32.cont [3/16] 0.0, 128
  %600 = vxpose.xlu0.b32.cont [4/16] 0.0, 128
  %601 = vxpose.xlu0.b32.cont [5/16] 0.0, 128
  %602 = vxpose.xlu0.b32.cont [6/16] 0.0, 128
  %603 = vxpose.xlu0.b32.cont [7/16] 0.0, 128
  %604 = vxpose.xlu0.b32.cont [8/16] 0.0, 128
  %605 = vxpose.xlu0.b32.cont [9/16] 0.0, 128
  %606 = vxpose.xlu0.b32.cont [10/16] 0.0, 128
  %607 = vxpose.xlu0.b32.cont [11/16] 0.0, 128
  %608 = vxpose.xlu0.b32.cont [12/16] 0.0, 128
  %609 = vxpose.xlu0.b32.cont [13/16] 0.0, 128
  %610 = vxpose.xlu0.b32.cont [14/16] 0.0, 128
  %611 = vxpose.xlu0.b32.cont [15/16] 0.0, 128
  %612 = vxpose.xlu0.b32.end [16/16] 0.0, 128
  %v613 = vpop.trf.xlu0
  %v614 = vpop.trf.xlu0
  %v615 = vpop.trf.xlu0
  %v616 = vpop.trf.xlu0
  %v617 = vpop.trf.xlu0
  %v618 = vpop.trf.xlu0
  %v619 = vpop.trf.xlu0
  %v620 = vpop.trf.xlu0
  %v621 = vpop.trf.xlu0
  %v622 = vpop.trf.xlu0
  %v623 = vpop.trf.xlu0
  %v624 = vpop.trf.xlu0
  %v625 = vpop.trf.xlu0
  %v626 = vpop.trf.xlu0
  %v627 = vpop.trf.xlu0
  %v628 = vpop.trf.xlu0
  %v629 = vperm.slane %v613, 0
  %v630 = vadd.f32 %v593, %v629
  %v631 = vadd.f32 %v596, %v629
  %vm632 = vcmp.gt.f32.partialorder %v630, 0.0
  %vm633 = vcmp.gt.f32.partialorder %v631, 0.0
  %v634 = vmul.f32 %v630, 0.2
  %v635 = vmul.f32 %v631, 0.2
  %v636 = vsel %vm632, %v630, %v634
  %v637 = vsel %vm633, %v631, %v635
  %v638 = vld [vmem:[%s2] sm:$0xff]
  %v639 = vld [vmem:[%s2 + $0x8] sm:$0xff]
  %v640 = vadd.f32 %v636, %v638
  %v641 = vadd.f32 %v637, %v639
  %v642 = vsel %vm48, %v640, -inf
  %643 = vmax.xlane.f32.xlu0 %v642
  %v644 = vpop.xlane.xlu0 %643
  %v645 = vsel %vm48, %v641, -inf
  %646 = vmax.xlane.f32.xlu0 %v645
  %v647 = vpop.xlane.xlu0 %646
  %v648 = vsub.f32 %v640, %v644
  %v649 = vsub.f32 %v641, %v647
  %v650 = vmul.f32 %v648, 1.442695
  %v651 = vpow.pop %v650
  %v652 = vmul.f32 %v649, 1.442695
  %v653 = vpow.pop %v652
  %v655 = vsel %vm48, %v651, 0
  %v658 = vsel %vm48, %v653, 0
  %660 = vmatpush.msra.mxu0 0.0
  %661 = vmatpush.msra.mxu0 0.0
  %662 = vmatpush.msra.mxu0 0.0
  %663 = vmatpush.msra.mxu0 0.0
  %664 = vmatpush.msra.mxu0 0.0
  %665 = vmatpush.msra.mxu0 0.0
  %666 = vmatpush.msra.mxu0 0.0
  %667 = vmatpush.msra.mxu0 0.0
  %668 = vmatpush.msra.mxu0 0.0
  %669 = vmatpush.msra.mxu0 0.0
  %670 = vmatpush.msra.mxu0 0.0
  %671 = vmatpush.msra.mxu0 0.0
  %672 = vmatpush.msra.mxu0 0.0
  %673 = vmatpush.msra.mxu0 0.0
  %674 = vmatpush.msra.mxu0 %v570
  %675 = vmatpush.msra.mxu0 %v567
  %676 = vmatmul.f32.gmra.mxu0 %v655
  %v677 = vpop.f32.mrf.mxu0
  %v678 = vadd.f32 0.0, %v677
  %679 = vmatmul.f32.gmra.mxu0 %v658
  %v680 = vpop.f32.mrf.mxu0
  %v681 = vadd.f32 0.0, %v680
  %682 = vdwg.mxu0
  %v683 = vsel %vm48, %v651, 0.0
  %684 = vadd.xlane.f32.xlu0 %v683
  %v685 = vpop.xlane.xlu0 %684
  %v686 = vsel %vm48, %v653, 0.0
  %687 = vadd.xlane.f32.xlu0 %v686
  %v688 = vpop.xlane.xlu0 %687
  %v689 = vrcp.pop %v685
  %v690 = vmul.f32 %v685, %v689
  %v691 = vsub.f32 1.0, %v690
  %v692 = vmul.f32 %v689, %v691
  %v693 = vadd.f32 %v689, %v692
  %vm694 = vweird.f32 %v685
  %vm695 = vweird.f32 %v689
  %vm696 = vmor %vm694, %vm695
  %v697 = vsel %vm696, %v689, %v693
  %v698 = vand.u32 2147483647, %v685
  %vm699 = vcmp.eq.f32.partialorder %v698, 8.507059e+37
  %v700 = vand.u32 %v685, 2147483648
  %v701 = vor.u32 1.1754944e-38, %v700
  %v702 = vsel %vm699, %v701, %v697
  %v703 = vmul.f32 %v678, %v702
  %v704 = vrcp.pop %v688
  %v705 = vmul.f32 %v688, %v704
  %v706 = vsub.f32 1.0, %v705
  %v707 = vmul.f32 %v704, %v706
  %v708 = vadd.f32 %v704, %v707
  %vm709 = vweird.f32 %v688
  %vm710 = vweird.f32 %v704
  %vm711 = vmor %vm709, %vm710
  %v712 = vsel %vm711, %v704, %v708
  %v713 = vand.u32 2147483647, %v688
  %vm714 = vcmp.eq.f32.partialorder %v713, 8.507059e+37
  %v715 = vand.u32 %v688, 2147483648
  %v716 = vor.u32 1.1754944e-38, %v715
  %v717 = vsel %vm714, %v716, %v712
  %v718 = vmul.f32 %v681, %v717
  %v719 = vld [vmem:[%s12] sm:$0x1]
  %v721 = vperm.slane %v719, 0
  %v723 = vadd.f32 %v703, %v721
  %v724 = vadd.f32 %v718, %v721
  %v725 = vsel %vm578, %v723, -inf
  %726 = vmax.xlane.f32.xlu0 %v725
  %v727 = vpop.xlane.xlu0 %726
  %v728 = vsel %vm578, %v724, -inf
  %729 = vmax.xlane.f32.xlu0 %v728
  %v730 = vpop.xlane.xlu0 %729
  %v731 = vsub.f32 %v723, %v727
  %v732 = vsub.f32 %v724, %v730
  %v733 = vmul.f32 %v731, 1.442695
  %v734 = vpow.pop %v733
  %v735 = vmul.f32 %v732, 1.442695
  %v736 = vpow.pop %v735
  %v737 = vsel %vm578, %v734, 0.0
  %738 = vadd.xlane.f32.xlu0 %v737
  %v739 = vpop.xlane.xlu0 %738
  %v740 = vsel %vm578, %v736, 0.0
  %741 = vadd.xlane.f32.xlu0 %v740
  %v742 = vpop.xlane.xlu0 %741
  %v743 = vlog2.pop %v739
  %v744 = vmul.f32 %v743, 0.6931472
  %v745 = vlog2.pop %v742
  %v746 = vmul.f32 %v745, 0.6931472
  %v747 = vsub.f32 %v731, %v744
  %v748 = vsub.f32 %v732, %v746
  %749 = vst.msk [vmem:[%s13] sm:$0xff] %vm578, %v747
  %750 = vst.msk [vmem:[%s13 + $0x8] sm:$0xff] %vm578, %v748
  // Predicated region
  $region54: #{tpu_custom_call.1} parent=0 // pred_check
    _
  $region55: #{tpu_custom_call.1} parent=0 // pred_check_branch
    %752 = sbr.rel (0) target = $region57
  $region56: #{tpu_custom_call.1} parent=0 // pred_region
    _
  $region57: #{tpu_custom_call.1} parent=0 // pred_fallthru
    _
  // Predicated region
  $region58: #{tpu_custom_call.1} parent=0 // pred_check
    _
  $region59: #{tpu_custom_call.1} parent=0 // pred_check_branch
    %754 = sbr.rel (0) target = $region61
  $region60: #{tpu_custom_call.1} parent=0 // pred_region
    _
  $region61: #{tpu_custom_call.1} parent=0 // pred_fallthru
    _

</llo_original>
